<compile_context>
chip_gen: v7x
topology: tpu7x:2x2x1
jax: 0.10.0
libtpu: 0.0.40
codegen_flags: <defaults>
</compile_context>

<pallas_src>
import functools

import jax
import jax.numpy as jnp
from jax.experimental import pallas as pl
from jax.experimental.pallas import tpu as pltpu


def _smooth_ner_kernel(h_ref, haug_ref, w_ref, b_ref, tgt_ref, out_ref, *, n_rows):
    tm = h_ref.shape[0]

    # Valid-row mask for the tail tile: no wrapper-side padding of the big hidden
    # streams, so the last block's OOB rows hold unspecified data and MUST be masked
    # by index (not by relying on zero targets -> 0 * NaN = NaN).
    row0 = pl.program_id(0) * tm
    row_ids = row0 + jax.lax.broadcasted_iota(jnp.int32, (tm, 1), 0)   # [tm, 1]
    row_mask = row_ids < n_rows                                        # [tm, 1] bool

    w = w_ref[...]                               # [H, L], native dtype (bf16 or f32)
    b = b_ref[...].astype(jnp.float32)           # [1, L]
    # Mask targets first: where-select blocks garbage/NaN tail values.
    t = jnp.where(row_mask, tgt_ref[...].astype(jnp.float32), 0.0)     # [tm, L]

    # Shared by BOTH branches (computed once per target tile):
    row_sum_t = jnp.sum(t, axis=-1, keepdims=True)                     # [tm, 1]
    # xlogy(t, t) with the 0*log(0) == 0 convention (matches torch KLDivLoss).
    t_log_t = jnp.where(t > 0, t * jnp.log(jnp.where(t > 0, t, 1.0)), 0.0)
    sum_t_log_t = jnp.sum(t_log_t)

    def cross_entropy(h_tile):
        # fc: logits = h @ W + b  (MXU matmul, f32 accumulation; bf16 MXU when the
        # inputs are bf16).  Softmax / KL math stays in f32.
        logits = jnp.dot(h_tile, w, preferred_element_type=jnp.float32) + b   # [tm, L]
        m = jnp.max(logits, axis=-1, keepdims=True)                           # [tm, 1]
        lse = jnp.log(jnp.sum(jnp.exp(logits - m), axis=-1, keepdims=True))   # [tm, 1]
        # sum(t * log_softmax(logits)) rewritten to trim full-tile broadcast ops on
        # the 9/128-lane-sparse logits tile:
        #   sum(t * (logits - m - lse)) = sum(t * logits) - row_sum_t * (m + lse)
        per_row = (jnp.sum(t * logits, axis=-1, keepdims=True)
                   - row_sum_t * (m + lse))                                   # [tm, 1]
        # Tail rows may hold garbage hidden data -> NaN/inf logits; select them out.
        return jnp.sum(jnp.where(row_mask, per_row, 0.0))

    # KL(t || p) + KL(t || p_aug), un-normalized; the batchmean divide is hoisted
    # to the JAX wrapper and applied once over the summed partials.
    partial_sum = (2.0 * sum_t_log_t
                   - cross_entropy(h_ref[...])
                   - cross_entropy(haug_ref[...]))

    # Broadcast the scalar partial across this tile's private (1, 8, 128) output
    # block: a single unmasked lane-dense vst, and disjoint blocks per grid step so
    # the grid axis can be "parallel".  The wrapper reads [:, 0, 0].
    out_ref[...] = jnp.full(out_ref.shape, partial_sum, dtype=jnp.float32)


def _min_sublane(dtype):
    return {4: 8, 2: 16, 1: 32}[jnp.dtype(dtype).itemsize]


def smooth_ner_loss(h, h_aug, w, b, targets, batch_size, *, tm=None):
    """h, h_aug: [B, S, H]; w: [H, L]; b: [L]; targets: [B, S, L] -> scalar KL loss."""
    B, S, H = h.shape
    L = w.shape[1]
    N = B * S

    h2 = h.reshape(N, H)
    haug2 = h_aug.reshape(N, H)
    t2 = targets.reshape(N, L)               # streamed in native dtype, cast in-kernel
    b2 = b.reshape(1, L).astype(jnp.float32)
    w2 = w.astype(h2.dtype)                  # match LHS dtype -> single MXU path

    hid_isz = jnp.dtype(h2.dtype).itemsize
    tgt_isz = jnp.dtype(t2.dtype).itemsize
    # Sublane minimum over all row-tiled streams (f32:8, bf16:16, int8/fp8:32).
    sublane_min = max(_min_sublane(h2.dtype), _min_sublane(t2.dtype))

    if tm is None:
        # bf16 hidden tiles are half the VMEM -> take a bigger bite; keep tm a
        # multiple of 256 (v6e/v7x MXU row tile) while preserving >=2 grid tiles so
        # v7x's two TensorCores both get work (neutral on v5e/v6e).
        tm = 2048 if hid_isz <= 2 else 1024
        while tm > 256 and pl.cdiv(N, tm) < 2:
            tm //= 2
    assert tm % sublane_min == 0, (
        f"tm={tm} must be a multiple of {sublane_min} for dtypes "
        f"{h2.dtype}/{t2.dtype} (sublane packing)")

    num_tiles = pl.cdiv(N, tm)

    # VMEM budget: 2 hidden streams x 2 pipeline buffers + lane-padded targets (a
    # (tm, 9) block occupies tm*128 lanes in VMEM) + resident weight/bias/output.
    lane = 128
    l_pad = pl.cdiv(L, lane) * lane
    working = (2 * 2 * tm * H * hid_isz
               + 2 * tm * l_pad * tgt_isz
               + H * l_pad * jnp.dtype(w2.dtype).itemsize
               + 2 * 8 * lane * 4)
    # >=16 MiB floor (v5e scoped default), <=48 MiB cap (v7x has 64 MiB physical).
    vmem_limit = int(min(max(working * 1.25 + (2 << 20), 16 << 20), 48 << 20))

    grid_spec = pltpu.PrefetchScalarGridSpec(
        num_scalar_prefetch=0,
        grid=(num_tiles,),
        in_specs=[
            pl.BlockSpec((tm, H), lambda i: (i, 0)),   # h tile (streamed)
            pl.BlockSpec((tm, H), lambda i: (i, 0)),   # h_aug tile (streamed)
            pl.BlockSpec((H, L), lambda i: (0, 0)),    # fc weight (VMEM-resident)
            pl.BlockSpec((1, L), lambda i: (0, 0)),    # fc bias   (VMEM-resident)
            pl.BlockSpec((tm, L), lambda i: (i, 0)),   # targets tile (streamed)
        ],
        out_specs=pl.BlockSpec((1, 8, 128), lambda i: (i, 0, 0)),
    )

    # Advisory cost so XLA overlaps this loss with the surrounding transformer work.
    cost = pl.CostEstimate(
        flops=2 * 2 * N * H * L,
        transcendentals=3 * 2 * N * L,
        bytes_accessed=(2 * N * H * hid_isz
                        + N * L * tgt_isz
                        + H * L * jnp.dtype(w2.dtype).itemsize
                        + num_tiles * 8 * 128 * 4),
    )

    partials = pl.pallas_call(
        functools.partial(_smooth_ner_kernel, n_rows=N),
        out_shape=jax.ShapeDtypeStruct((num_tiles, 8, 128), jnp.float32),
        grid_spec=grid_spec,
        compiler_params=pltpu.CompilerParams(
            dimension_semantics=("parallel",),
            vmem_limit_bytes=vmem_limit),
        cost_estimate=cost,
    )(h2, haug2, w2, b2, t2)

    # Sum per-tile partials and apply the batchmean divide once: torch KLDivLoss
    # (reduction='batchmean') divides by input.size(0) = B since it sees [B, S, L].
    return jnp.sum(partials[:, 0, 0]) / jnp.float32(batch_size)


def reference_loss(h, h_aug, w, b, targets, batch_size):
    """Pure-JAX reference matching the torch module's forward."""
    def branch(hh):
        logits = jnp.einsum("bsh,hl->bsl", hh.astype(jnp.float32),
                            w.astype(jnp.float32),
                            preferred_element_type=jnp.float32) + b
        log_p = jax.nn.log_softmax(logits, axis=2)
        t = targets.astype(jnp.float32)
        t_log_t = jnp.where(t > 0, t * jnp.log(jnp.where(t > 0, t, 1.0)), 0.0)
        return jnp.sum(t_log_t - t * log_p) / batch_size
    return branch(h) + branch(h_aug)


if __name__ == "__main__":
    # Small shapes consistent with the module: hidden dim fixed at 768 (fc = Linear(768, L)).
    B, S, H, L = 2, 8, 768, 9

    key = jax.random.PRNGKey(0)
    k_h, k_ha, k_w, k_b, k_t = jax.random.split(key, 5)

    h = jax.random.normal(k_h, (B, S, H), dtype=jnp.float32)          # transformer output
    h_aug = jax.random.normal(k_ha, (B, S, H), dtype=jnp.float32)     # augmented output
    w = jax.random.normal(k_w, (H, L), dtype=jnp.float32) * 0.02      # fc weight ([H, L])
    b = jax.random.normal(k_b, (L,), dtype=jnp.float32) * 0.02        # fc bias
    targets = jax.nn.softmax(
        jax.random.normal(k_t, (B, S, L), dtype=jnp.float32), axis=-1)  # smoothed labels

    ref_f32 = reference_loss(h, h_aug, w, b, targets, batch_size=B)

    # f32 path, tm=8 -> grid of 2 exact tiles (exercises tiling + per-tile partials).
    loss_f32 = jax.block_until_ready(
        smooth_ner_loss(h, h_aug, w, b, targets, batch_size=B, tm=8))
    assert jnp.allclose(loss_f32, ref_f32, rtol=1e-4, atol=1e-4), (loss_f32, ref_f32)

    # f32 path, default tm (auto-selected) -> single ragged tile; the in-kernel
    # row-index mask handles the out-of-bounds tail (no wrapper-side padding).
    loss_auto = jax.block_until_ready(
        smooth_ner_loss(h, h_aug, w, b, targets, batch_size=B))
    assert jnp.allclose(loss_auto, ref_f32, rtol=1e-4, atol=1e-4), (loss_auto, ref_f32)

    # bf16 hidden-state / weight path (halves HBM bytes of the dominant streams at
    # scale); reference computed on the same bf16-rounded inputs in f32 math.
    # tm=16 respects the bf16 (16, 128) minimum tile.
    h_bf, ha_bf, w_bf = (h.astype(jnp.bfloat16), h_aug.astype(jnp.bfloat16),
                         w.astype(jnp.bfloat16))
    ref_bf16 = reference_loss(h_bf.astype(jnp.float32), ha_bf.astype(jnp.float32),
                              w_bf.astype(jnp.float32), b, targets, batch_size=B)
    loss_bf16 = jax.block_until_ready(
        smooth_ner_loss(h_bf, ha_bf, w_bf, b, targets, batch_size=B, tm=16))
    assert jnp.allclose(loss_bf16, ref_bf16, rtol=5e-3, atol=5e-3), (loss_bf16, ref_bf16)

    # bf16 path with a ragged tail (tm=32 > N=16) -> exercises masking with packed
    # sublanes.
    loss_bf16_tail = jax.block_until_ready(
        smooth_ner_loss(h_bf, ha_bf, w_bf, b, targets, batch_size=B, tm=32))
    assert jnp.allclose(loss_bf16_tail, ref_bf16, rtol=5e-3, atol=5e-3), (
        loss_bf16_tail, ref_bf16)

    print("KERNEL_OK")
</pallas_src>

<mosaic_0001>
module attributes {stable_mosaic.version = 11 : i64} {
  func.func @_smooth_ner_kernel(%arg0: i32, %arg1: memref<8x768xf32, #tpu.memory_space<vmem>>, %arg2: memref<8x768xf32, #tpu.memory_space<vmem>>, %arg3: memref<768x9xf32, #tpu.memory_space<vmem>>, %arg4: memref<1x9xf32, #tpu.memory_space<vmem>>, %arg5: memref<8x9xf32, #tpu.memory_space<vmem>>, %arg6: memref<1x8x128xf32, #tpu.memory_space<vmem>>) attributes {dimension_semantics = [#tpu.dimension_semantics<parallel>], iteration_bounds = array<i64: 2>, scalar_prefetch = 0 : i64, scratch_operands = 0 : i64, tpu.core_type = #tpu.core_type<tc>, window_params = [{transform_indices = @transform_0, window_bounds = array<i64: 8, 768>}, {transform_indices = @transform_1, window_bounds = array<i64: 8, 768>}, {pipeline_mode = #tpu.pipeline_mode<synchronous>, transform_indices = @transform_2, window_bounds = array<i64: 768, 9>}, {pipeline_mode = #tpu.pipeline_mode<synchronous>, transform_indices = @transform_3, window_bounds = array<i64: 1, 9>}, {transform_indices = @transform_4, window_bounds = array<i64: 8, 9>}, {transform_indices = @transform_5, window_bounds = array<i64: 1, 8, 128>}]} {
    %c8_i32 = arith.constant 8 : i32
    %0 = arith.muli %arg0, %c8_i32 : i32
    %1 = tpu.iota {dimensions = array<i32: 0>} : vector<8x1xi32>
    %2 = vector.broadcast %0 : i32 to vector<8x1xi32>
    %3 = arith.addi %2, %1 : vector<8x1xi32>
    %c16_i32 = arith.constant 16 : i32
    %4 = vector.broadcast %c16_i32 : i32 to vector<8x1xi32>
    %5 = arith.cmpi slt, %3, %4 : vector<8x1xi32>
    %c0 = arith.constant 0 : index
    %c0_0 = arith.constant 0 : index
    %6 = vector.load %arg3[%c0, %c0_0] : memref<768x9xf32, #tpu.memory_space<vmem>>, vector<768x9xf32>
    %c0_1 = arith.constant 0 : index
    %c0_2 = arith.constant 0 : index
    %7 = vector.load %arg4[%c0_1, %c0_2] : memref<1x9xf32, #tpu.memory_space<vmem>>, vector<1x9xf32>
    %c0_3 = arith.constant 0 : index
    %c0_4 = arith.constant 0 : index
    %8 = vector.load %arg5[%c0_3, %c0_4] : memref<8x9xf32, #tpu.memory_space<vmem>>, vector<8x9xf32>
    %cst = arith.constant 0.000000e+00 : f32
    %9 = vector.shape_cast %5 : vector<8x1xi1> to vector<8x1xi1>
    %10 = vector.broadcast %9 : vector<8x1xi1> to vector<8x9xi1>
    %11 = vector.broadcast %cst : f32 to vector<8x9xf32>
    %12 = arith.select %10, %8, %11 : vector<8x9xi1>, vector<8x9xf32>
    %cst_5 = arith.constant dense<0.000000e+00> : vector<8xf32>
    %13 = vector.multi_reduction <add>, %12, %cst_5 [1] : vector<8x9xf32> to vector<8xf32>
    %14 = vector.shape_cast %13 : vector<8xf32> to vector<8x1xf32>
    %cst_6 = arith.constant 0.000000e+00 : f32
    %15 = vector.broadcast %cst_6 : f32 to vector<8x9xf32>
    %16 = arith.cmpf ogt, %12, %15 : vector<8x9xf32>
    %cst_7 = arith.constant 0.000000e+00 : f32
    %17 = vector.broadcast %cst_7 : f32 to vector<8x9xf32>
    %18 = arith.cmpf ogt, %12, %17 : vector<8x9xf32>
    %cst_8 = arith.constant 1.000000e+00 : f32
    %19 = vector.broadcast %cst_8 : f32 to vector<8x9xf32>
    %20 = arith.select %18, %12, %19 : vector<8x9xi1>, vector<8x9xf32>
    %21 = math.log %20 : vector<8x9xf32>
    %22 = arith.mulf %12, %21 : vector<8x9xf32>
    %cst_9 = arith.constant 0.000000e+00 : f32
    %23 = vector.broadcast %cst_9 : f32 to vector<8x9xf32>
    %24 = arith.select %16, %22, %23 : vector<8x9xi1>, vector<8x9xf32>
    %25 = vector.shape_cast %24 : vector<8x9xf32> to vector<1x8x9xf32>
    %cst_10 = arith.constant dense<0.000000e+00> : vector<1xf32>
    %26 = vector.multi_reduction <add>, %25, %cst_10 [1, 2] : vector<1x8x9xf32> to vector<1xf32>
    %27 = vector.shape_cast %26 : vector<1xf32> to vector<1x1x1xf32>
    %28 = vector.extract %27[0, 0, 0] : f32 from vector<1x1x1xf32>
    %cst_11 = arith.constant 2.000000e+00 : f32
    %29 = arith.mulf %cst_11, %28 : f32
    %c0_12 = arith.constant 0 : index
    %c0_13 = arith.constant 0 : index
    %30 = vector.load %arg1[%c0_12, %c0_13] : memref<8x768xf32, #tpu.memory_space<vmem>>, vector<8x768xf32>
    %cst_14 = arith.constant dense<0.000000e+00> : vector<8x9xf32>
    %31 = tpu.matmul %30, %6, %cst_14 {dimension_numbers = #tpu.dot_dimension_numbers<[1], [0], [0], [1], [0, 0, 1, 1], [], []>} : vector<8x768xf32>, vector<768x9xf32>, vector<8x9xf32> -> vector<8x9xf32>
    %32 = vector.broadcast %7 : vector<1x9xf32> to vector<8x9xf32>
    %33 = arith.addf %31, %32 : vector<8x9xf32>
    %cst_15 = arith.constant dense<0xFF800000> : vector<8xf32>
    %34 = vector.multi_reduction <maximumf>, %33, %cst_15 [1] : vector<8x9xf32> to vector<8xf32>
    %35 = vector.shape_cast %34 : vector<8xf32> to vector<8x1xf32>
    %36 = vector.broadcast %35 : vector<8x1xf32> to vector<8x9xf32>
    %37 = arith.subf %33, %36 : vector<8x9xf32>
    %38 = math.exp %37 : vector<8x9xf32>
    %cst_16 = arith.constant dense<0.000000e+00> : vector<8xf32>
    %39 = vector.multi_reduction <add>, %38, %cst_16 [1] : vector<8x9xf32> to vector<8xf32>
    %40 = vector.shape_cast %39 : vector<8xf32> to vector<8x1xf32>
    %41 = math.log %40 : vector<8x1xf32>
    %42 = arith.mulf %12, %33 : vector<8x9xf32>
    %cst_17 = arith.constant dense<0.000000e+00> : vector<8xf32>
    %43 = vector.multi_reduction <add>, %42, %cst_17 [1] : vector<8x9xf32> to vector<8xf32>
    %44 = vector.shape_cast %43 : vector<8xf32> to vector<8x1xf32>
    %45 = arith.addf %35, %41 : vector<8x1xf32>
    %46 = arith.mulf %14, %45 : vector<8x1xf32>
    %47 = arith.subf %44, %46 : vector<8x1xf32>
    %cst_18 = arith.constant 0.000000e+00 : f32
    %48 = vector.broadcast %cst_18 : f32 to vector<8x1xf32>
    %49 = arith.select %5, %47, %48 : vector<8x1xi1>, vector<8x1xf32>
    %50 = vector.shape_cast %49 : vector<8x1xf32> to vector<1x8x1xf32>
    %cst_19 = arith.constant dense<0.000000e+00> : vector<1xf32>
    %51 = vector.multi_reduction <add>, %50, %cst_19 [1, 2] : vector<1x8x1xf32> to vector<1xf32>
    %52 = vector.shape_cast %51 : vector<1xf32> to vector<1x1x1xf32>
    %53 = vector.extract %52[0, 0, 0] : f32 from vector<1x1x1xf32>
    %54 = arith.subf %29, %53 : f32
    %c0_20 = arith.constant 0 : index
    %c0_21 = arith.constant 0 : index
    %55 = vector.load %arg2[%c0_20, %c0_21] : memref<8x768xf32, #tpu.memory_space<vmem>>, vector<8x768xf32>
    %cst_22 = arith.constant dense<0.000000e+00> : vector<8x9xf32>
    %56 = tpu.matmul %55, %6, %cst_22 {dimension_numbers = #tpu.dot_dimension_numbers<[1], [0], [0], [1], [0, 0, 1, 1], [], []>} : vector<8x768xf32>, vector<768x9xf32>, vector<8x9xf32> -> vector<8x9xf32>
    %57 = vector.broadcast %7 : vector<1x9xf32> to vector<8x9xf32>
    %58 = arith.addf %56, %57 : vector<8x9xf32>
    %cst_23 = arith.constant dense<0xFF800000> : vector<8xf32>
    %59 = vector.multi_reduction <maximumf>, %58, %cst_23 [1] : vector<8x9xf32> to vector<8xf32>
    %60 = vector.shape_cast %59 : vector<8xf32> to vector<8x1xf32>
    %61 = vector.broadcast %60 : vector<8x1xf32> to vector<8x9xf32>
    %62 = arith.subf %58, %61 : vector<8x9xf32>
    %63 = math.exp %62 : vector<8x9xf32>
    %cst_24 = arith.constant dense<0.000000e+00> : vector<8xf32>
    %64 = vector.multi_reduction <add>, %63, %cst_24 [1] : vector<8x9xf32> to vector<8xf32>
    %65 = vector.shape_cast %64 : vector<8xf32> to vector<8x1xf32>
    %66 = math.log %65 : vector<8x1xf32>
    %67 = arith.mulf %12, %58 : vector<8x9xf32>
    %cst_25 = arith.constant dense<0.000000e+00> : vector<8xf32>
    %68 = vector.multi_reduction <add>, %67, %cst_25 [1] : vector<8x9xf32> to vector<8xf32>
    %69 = vector.shape_cast %68 : vector<8xf32> to vector<8x1xf32>
    %70 = arith.addf %60, %66 : vector<8x1xf32>
    %71 = arith.mulf %14, %70 : vector<8x1xf32>
    %72 = arith.subf %69, %71 : vector<8x1xf32>
    %cst_26 = arith.constant 0.000000e+00 : f32
    %73 = vector.broadcast %cst_26 : f32 to vector<8x1xf32>
    %74 = arith.select %5, %72, %73 : vector<8x1xi1>, vector<8x1xf32>
    %75 = vector.shape_cast %74 : vector<8x1xf32> to vector<1x8x1xf32>
    %cst_27 = arith.constant dense<0.000000e+00> : vector<1xf32>
    %76 = vector.multi_reduction <add>, %75, %cst_27 [1, 2] : vector<1x8x1xf32> to vector<1xf32>
    %77 = vector.shape_cast %76 : vector<1xf32> to vector<1x1x1xf32>
    %78 = vector.extract %77[0, 0, 0] : f32 from vector<1x1x1xf32>
    %79 = arith.subf %54, %78 : f32
    %80 = vector.broadcast %79 : f32 to vector<1x8x128xf32>
    %c0_28 = arith.constant 0 : index
    %c0_29 = arith.constant 0 : index
    %c0_30 = arith.constant 0 : index
    %81 = vector.load %arg6[%c0_28, %c0_29, %c0_30] : memref<1x8x128xf32, #tpu.memory_space<vmem>>, vector<1x8x128xf32>
    tpu.vector_store %arg6[%c0_28, %c0_29, %c0_30], %80 {strides = array<i32>} : memref<1x8x128xf32, #tpu.memory_space<vmem>>, vector<1x8x128xf32>,
    return
  }
  func.func @transform_0(%arg0: i32) -> (i32, i32) {
    %c0_i32 = arith.constant 0 : i32
    %c0_i32_0 = arith.constant 0 : i32
    return %arg0, %c0_i32 : i32, i32
  }
  func.func @transform_1(%arg0: i32) -> (i32, i32) {
    %c0_i32 = arith.constant 0 : i32
    %c0_i32_0 = arith.constant 0 : i32
    return %arg0, %c0_i32 : i32, i32
  }
  func.func @transform_2(%arg0: i32) -> (i32, i32) {
    %c0_i32 = arith.constant 0 : i32
    %c0_i32_0 = arith.constant 0 : i32
    %c0_i32_1 = arith.constant 0 : i32
    return %c0_i32, %c0_i32_0 : i32, i32
  }
  func.func @transform_3(%arg0: i32) -> (i32, i32) {
    %c0_i32 = arith.constant 0 : i32
    %c0_i32_0 = arith.constant 0 : i32
    %c0_i32_1 = arith.constant 0 : i32
    return %c0_i32, %c0_i32_0 : i32, i32
  }
  func.func @transform_4(%arg0: i32) -> (i32, i32) {
    %c0_i32 = arith.constant 0 : i32
    %c0_i32_0 = arith.constant 0 : i32
    return %arg0, %c0_i32 : i32, i32
  }
  func.func @transform_5(%arg0: i32) -> (i32, i32, i32) {
    %c0_i32 = arith.constant 0 : i32
    %c0_i32_0 = arith.constant 0 : i32
    %c0_i32_1 = arith.constant 0 : i32
    return %arg0, %c0_i32, %c0_i32_0 : i32, i32, i32
  }
}

</mosaic_0001>

<llo_original>
// kernel: tpu_custom_call.1
$region0: #{tpu_custom_call.1}
  #allocation0 [shape = 'u32[]', space=smem, size = 0x4, offset = 0x4, fixed_abs, tag = 'smem constant byte address 0x4 - core index']
  #allocation1 [shape = 'u32[144,128]{1,0:T(1,128)}', space=vmem, size = 0x12000, scoped, tag = 'internal scratch']
  %s0 = inlined_call_operand.vmem [shape: f32[16,768], index: 0, kind: input, shape index: {}]
  %s1 = inlined_call_operand.vmem [shape: f32[16,768], index: 1, kind: input, shape index: {}]
  %s2 = inlined_call_operand.vmem [shape: f32[768,9], index: 2, kind: input, shape index: {}]
  %s3 = inlined_call_operand.vmem [shape: f32[1,9], index: 3, kind: input, shape index: {}]
  %s4 = inlined_call_operand.vmem [shape: f32[16,9], index: 4, kind: input, shape index: {}]
  %s5 = inlined_call_operand.hbm [shape: f32[2,8,128], index: 5, kind: output, shape index: {}]
  %s6 = sld [smem:[#allocation0]]
  $region53: #{tpu_custom_call.1} parent=0
    _
  %s8 = ssub.s32 1, %s6
  %s9 = scalar_select 0, %s8, %s6
  $region1: #{tpu_custom_call.1} parent=0
    #allocation2 [shape = 'u8[8192]{0}', space=vmem, size = 0x2000, scoped, tag = 'output window, operand 0']
    #allocation3 [shape = 's32[2]{0}', space=sflag, size = 0x8, scoped, tag = 'scoped memory for tpu_custom_call.1']
    %10 = vsyncpa [#allocation3], 0
    %s11 = scalar_lea.sflag [#allocation3], 1
    %12 = vsyncpa %s11, 0
    loop: start=0, step=1, limit=4
    $region2: #{tpu_custom_call.1} parent=1 // loop_pre_header
      _
    $region3: #{tpu_custom_call.1} parent=1 // loop_header
      %s14 = sphi 0, %s18
      %p15 = scmp.ge.s32.totalorder %s14, 4
      %s24 = sphi 0, %s26
      %s27 = sphi 0, %s24
      %s28 = sphi 0, %s27
      %s44 = sphi 0, %s28
      %s50 = sphi 0, %s52
      %s53 = sphi 0, %s50
      %s54 = sphi 0, %s53
      %s70 = sphi 0, %s54
      %s74 = sphi 0, %s74
      %s76 = sphi 0, %s74
      %s77 = sphi 0, %s76
      %s91 = sphi 0, %s77
      %s95 = sphi 0, %s95
      %s97 = sphi 0, %s95
      %s98 = sphi 0, %s97
      %s112 = sphi 0, %s98
      %s118 = sphi 0, %s120
      %s121 = sphi 0, %s118
      %s122 = sphi 0, %s121
      %s138 = sphi 0, %s122
      %s144 = sphi 0, %s146
      %s147 = sphi 0, %s144
      %s148 = sphi 0, %s147
      %s164 = sphi 0, %s148
    $region4: #{tpu_custom_call.1} parent=1 // loop_header_branch
      %17 = sbr.rel (%p15) target = $region8
    $region5: #{tpu_custom_call.1} parent=1 // loop_body
      %s19 = ssub.s32 %s14, 1
      %s20 = ssub.s32 %s14, 2
      %s21 = sadd.s32 %s14, 1
      %s22 = ssub.s32 %s14, %s21
      %p23 = scmp.eq.s32.totalorder %s22, 0
      %s25 = sadd.s32 %s24, 1
      %s26 = scalar_select %p23, %s24, %s25
      %p29 = pneg %p23
      %p30 = scmp.eq.s32.totalorder %s14, 1
      %p31 = por %p29, %p30
      %p32 = scmp.ne.s32.totalorder %s24, %s27
      %p33 = scmp.eq.s32.totalorder %s14, 0
      %p34 = por %p32, %p33
      %p35 = scmp.ne.s32.totalorder %s24, %s27
      %p36 = scmp.eq.s32.totalorder %s19, 1
      %p37 = por %p35, %p36
      %p38 = scmp.ne.s32.totalorder %s27, %s28
      %p39 = scmp.eq.s32.totalorder %s19, 0
      %p40 = por %p38, %p39
      %p41 = scmp.ne.s32.totalorder %s27, %s28
      %p42 = scmp.eq.s32.totalorder %s20, 1
      %p43 = por %p41, %p42
      %p45 = scmp.ne.s32.totalorder %s28, %s44
      %p46 = scmp.eq.s32.totalorder %s20, 0
      %p47 = por %p45, %p46
      %s48 = ssub.s32 %s14, %s21
      %p49 = scmp.eq.s32.totalorder %s48, 0
      %s51 = sadd.s32 %s50, 1
      %s52 = scalar_select %p49, %s50, %s51
      %p55 = pneg %p49
      %p56 = scmp.eq.s32.totalorder %s14, 1
      %p57 = por %p55, %p56
      %p58 = scmp.ne.s32.totalorder %s50, %s53
      %p59 = scmp.eq.s32.totalorder %s14, 0
      %p60 = por %p58, %p59
      %p61 = scmp.ne.s32.totalorder %s50, %s53
      %p62 = scmp.eq.s32.totalorder %s19, 1
      %p63 = por %p61, %p62
      %p64 = scmp.ne.s32.totalorder %s53, %s54
      %p65 = scmp.eq.s32.totalorder %s19, 0
      %p66 = por %p64, %p65
      %p67 = scmp.ne.s32.totalorder %s53, %s54
      %p68 = scmp.eq.s32.totalorder %s20, 1
      %p69 = por %p67, %p68
      %p71 = scmp.ne.s32.totalorder %s54, %s70
      %p72 = scmp.eq.s32.totalorder %s20, 0
      %p73 = por %p71, %p72
      %s75 = sadd.s32 %s74, 1
      %p78 = scmp.eq.s32.totalorder %s14, 1
      %p79 = scmp.ne.s32.totalorder %s74, %s76
      %p80 = scmp.eq.s32.totalorder %s14, 0
      %p81 = por %p79, %p80
      %p82 = scmp.ne.s32.totalorder %s74, %s76
      %p83 = scmp.eq.s32.totalorder %s19, 1
      %p84 = por %p82, %p83
      %p85 = scmp.ne.s32.totalorder %s76, %s77
      %p86 = scmp.eq.s32.totalorder %s19, 0
      %p87 = por %p85, %p86
      %p88 = scmp.ne.s32.totalorder %s76, %s77
      %p89 = scmp.eq.s32.totalorder %s20, 1
      %p90 = por %p88, %p89
      %p92 = scmp.ne.s32.totalorder %s77, %s91
      %p93 = scmp.eq.s32.totalorder %s20, 0
      %p94 = por %p92, %p93
      %s96 = sadd.s32 %s95, 1
      %p99 = scmp.eq.s32.totalorder %s14, 1
      %p100 = scmp.ne.s32.totalorder %s95, %s97
      %p101 = scmp.eq.s32.totalorder %s14, 0
      %p102 = por %p100, %p101
      %p103 = scmp.ne.s32.totalorder %s95, %s97
      %p104 = scmp.eq.s32.totalorder %s19, 1
      %p105 = por %p103, %p104
      %p106 = scmp.ne.s32.totalorder %s97, %s98
      %p107 = scmp.eq.s32.totalorder %s19, 0
      %p108 = por %p106, %p107
      %p109 = scmp.ne.s32.totalorder %s97, %s98
      %p110 = scmp.eq.s32.totalorder %s20, 1
      %p111 = por %p109, %p110
      %p113 = scmp.ne.s32.totalorder %s98, %s112
      %p114 = scmp.eq.s32.totalorder %s20, 0
      %p115 = por %p113, %p114
      %s116 = ssub.s32 %s14, %s21
      %p117 = scmp.eq.s32.totalorder %s116, 0
      %s119 = sadd.s32 %s118, 1
      %s120 = scalar_select %p117, %s118, %s119
      %p123 = pneg %p117
      %p124 = scmp.eq.s32.totalorder %s14, 1
      %p125 = por %p123, %p124
      %p126 = scmp.ne.s32.totalorder %s118, %s121
      %p127 = scmp.eq.s32.totalorder %s14, 0
      %p128 = por %p126, %p127
      %p129 = scmp.ne.s32.totalorder %s118, %s121
      %p130 = scmp.eq.s32.totalorder %s19, 1
      %p131 = por %p129, %p130
      %p132 = scmp.ne.s32.totalorder %s121, %s122
      %p133 = scmp.eq.s32.totalorder %s19, 0
      %p134 = por %p132, %p133
      %p135 = scmp.ne.s32.totalorder %s121, %s122
      %p136 = scmp.eq.s32.totalorder %s20, 1
      %p137 = por %p135, %p136
      %p139 = scmp.ne.s32.totalorder %s122, %s138
      %p140 = scmp.eq.s32.totalorder %s20, 0
      %p141 = por %p139, %p140
      %s142 = ssub.s32 %s14, %s21
      %p143 = scmp.eq.s32.totalorder %s142, 0
      %s145 = sadd.s32 %s144, 1
      %s146 = scalar_select %p143, %s144, %s145
      %p149 = pneg %p143
      %p150 = scmp.eq.s32.totalorder %s14, 1
      %p151 = por %p149, %p150
      %p152 = scmp.ne.s32.totalorder %s144, %s147
      %p153 = scmp.eq.s32.totalorder %s14, 0
      %p154 = por %p152, %p153
      %p155 = scmp.ne.s32.totalorder %s144, %s147
      %p156 = scmp.eq.s32.totalorder %s19, 1
      %p157 = por %p155, %p156
      %p158 = scmp.ne.s32.totalorder %s147, %s148
      %p159 = scmp.eq.s32.totalorder %s19, 0
      %p160 = por %p158, %p159
      %p161 = scmp.ne.s32.totalorder %s147, %s148
      %p162 = scmp.eq.s32.totalorder %s20, 1
      %p163 = por %p161, %p162
      %p165 = scmp.ne.s32.totalorder %s148, %s164
      %p166 = scmp.eq.s32.totalorder %s20, 0
      %p167 = por %p165, %p166
      %p168 = scmp.le.s32.totalorder 1, %s14
      %p169 = scmp.lt.s32.totalorder %s14, 3
      %p170 = pnand %p168, %p169
      %p171 = pneg %p170
      // Predicated region
      $region9: #{tpu_custom_call.1} parent=5 // pred_check
        _
      $region10: #{tpu_custom_call.1} parent=5 // pred_check_branch
        %173 = sbr.rel (%p170) target = $region12
      $region11: #{tpu_custom_call.1} parent=5 // pred_region
        %s174 = ssub.s32 %s14, 1
        // Predicated region
        $region13: #{tpu_custom_call.1} parent=11 // pred_check
          %p175 = pneg %p87
        $region14: #{tpu_custom_call.1} parent=11 // pred_check_branch
          %177 = sbr.rel (%p175) target = $region16
        $region15: #{tpu_custom_call.1} parent=11 // pred_region
          _
        $region16: #{tpu_custom_call.1} parent=11 // pred_fallthru
          _
        // Predicated region
        $region17: #{tpu_custom_call.1} parent=11 // pred_check
          %p178 = pneg %p108
        $region18: #{tpu_custom_call.1} parent=11 // pred_check_branch
          %180 = sbr.rel (%p178) target = $region20
        $region19: #{tpu_custom_call.1} parent=11 // pred_region
          _
        $region20: #{tpu_custom_call.1} parent=11 // pred_fallthru
          _
      $region12: #{tpu_custom_call.1} parent=5 // pred_fallthru
        _
      %p181 = scmp.lt.s32.totalorder %s14, 2
      // Predicated region
      $region21: #{tpu_custom_call.1} parent=5 // pred_check
        %p182 = pneg %p181
      $region22: #{tpu_custom_call.1} parent=5 // pred_check_branch
        %184 = sbr.rel (%p182) target = $region24
      $region23: #{tpu_custom_call.1} parent=5 // pred_region
        // Predicated region
        $region25: #{tpu_custom_call.1} parent=23 // pred_check
          %p185 = pneg %p34
        $region26: #{tpu_custom_call.1} parent=23 // pred_check_branch
          %187 = sbr.rel (%p185) target = $region28
        $region27: #{tpu_custom_call.1} parent=23 // pred_region
          %p188 = scmp.lt.s32.totalorder %s14, 1
          %s189 = scalar_select %p188, %s14, 1
          %s190 = smul.addr %s189, 6
          %s191 = smul.addr %s190, 8
          %s192 = scalar_lea.vmem %s0, %s191
        $region28: #{tpu_custom_call.1} parent=23 // pred_fallthru
          _
        // Predicated region
        $region29: #{tpu_custom_call.1} parent=23 // pred_check
          %p193 = pneg %p60
        $region30: #{tpu_custom_call.1} parent=23 // pred_check_branch
          %195 = sbr.rel (%p193) target = $region32
        $region31: #{tpu_custom_call.1} parent=23 // pred_region
          %p196 = scmp.lt.s32.totalorder %s14, 1
          %s197 = scalar_select %p196, %s14, 1
          %s198 = smul.addr %s197, 6
          %s199 = smul.addr %s198, 8
          %s200 = scalar_lea.vmem %s1, %s199
        $region32: #{tpu_custom_call.1} parent=23 // pred_fallthru
          _
        // Predicated region
        $region33: #{tpu_custom_call.1} parent=23 // pred_check
          %p201 = pneg %p128
        $region34: #{tpu_custom_call.1} parent=23 // pred_check_branch
          %203 = sbr.rel (%p201) target = $region36
        $region35: #{tpu_custom_call.1} parent=23 // pred_region
          %p204 = scmp.lt.s32.totalorder %s14, 1
          %s205 = scalar_select %p204, %s14, 1
          %s206 = smul.addr %s205, 8
          %s207 = scalar_lea.vmem %s4, %s206
        $region36: #{tpu_custom_call.1} parent=23 // pred_fallthru
          _
      $region24: #{tpu_custom_call.1} parent=5 // pred_fallthru
        _
      %p208 = scmp.le.s32.totalorder 1, %s14
      %p209 = scmp.lt.s32.totalorder %s14, 3
      %p210 = pnand %p208, %p209
      %p211 = pneg %p210
      // Predicated region
      $region37: #{tpu_custom_call.1} parent=5 // pred_check
        _
      $region38: #{tpu_custom_call.1} parent=5 // pred_check_branch
        %213 = sbr.rel (%p210) target = $region40
      $region39: #{tpu_custom_call.1} parent=5 // pred_region
        %s214 = ssub.s32 %s14, 1
        %p215 = scmp.lt.s32.totalorder %s19, 1
        %s216 = scalar_select %p215, %s19, 1
        %s217 = smul.addr %s216, 6
        %s218 = smul.addr %s217, 8
        %s219 = scalar_lea.vmem %s0, %s218
        %p220 = pneg %p40
        %p221 = pneg %p37
        %p222 = scmp.lt.s32.totalorder %s19, 1
        %s223 = scalar_select %p222, %s19, 1
        %s224 = smul.addr %s223, 6
        %s225 = smul.addr %s224, 8
        %s226 = scalar_lea.vmem %s1, %s225
        %p227 = pneg %p66
        %p228 = pneg %p63
        %p229 = pneg %p87
        %p230 = pneg %p84
        %p231 = pneg %p108
        %p232 = pneg %p105
        %p233 = scmp.lt.s32.totalorder %s19, 1
        %s234 = scalar_select %p233, %s19, 1
        %s235 = smul.addr %s234, 8
        %s236 = scalar_lea.vmem %s4, %s235
        %p237 = pneg %p134
        %p238 = pneg %p131
        %p239 = pneg %p160
        %p240 = pneg %p157
        %s241 = sand.u32 %s147, 1
        %s242 = scalar_lea.sflag [#allocation3], %s241
        %s243 = sand.u32 %s147, 1
        %s244 = smul.addr %s243, 8
        %s245 = scalar_lea.vmem [#allocation2], %s244
        %p246 = scmp.lt.s32.totalorder %s19, 1
        %s247 = scalar_select %p246, %s19, 1
        %s248 = smul.addr %s247, 6
        %s249 = smul.addr %s248, 8
        %s250 = scalar_lea.vmem %s0, %s249
        %p251 = scmp.lt.s32.totalorder %s19, 1
        %s252 = scalar_select %p251, %s19, 1
        %s253 = smul.addr %s252, 6
        %s254 = smul.addr %s253, 8
        %s255 = scalar_lea.vmem %s1, %s254
        %p256 = scmp.lt.s32.totalorder %s19, 1
        %s257 = scalar_select %p256, %s19, 1
        %s258 = smul.addr %s257, 8
        %s259 = scalar_lea.vmem %s4, %s258
        %s260 = smul.u32 %s19, 8
        %v261 = vlaneseq
        %v262 = vshrl.u32 %v261, 7
        %v263 = vstv %s260
        %v264 = vadd.s32 %v263, %v262
        %vm265 = vcmp.lt.s32.totalorder %v264, 16
        %v266 = vld [vmem:[%s2] sm:$0xff]
        %v267 = vld [vmem:[%s2 + $0x8] sm:$0xff]
        %v268 = vld [vmem:[%s2 + $0x10] sm:$0xff]
        %v269 = vld [vmem:[%s2 + $0x18] sm:$0xff]
        %v270 = vld [vmem:[%s2 + $0x20] sm:$0xff]
        %v271 = vld [vmem:[%s2 + $0x28] sm:$0xff]
        %v272 = vld [vmem:[%s2 + $0x30] sm:$0xff]
        %v273 = vld [vmem:[%s2 + $0x38] sm:$0xff]
        %v274 = vld [vmem:[%s2 + $0x40] sm:$0xff]
        %v275 = vld [vmem:[%s2 + $0x48] sm:$0xff]
        %v276 = vld [vmem:[%s2 + $0x50] sm:$0xff]
        %v277 = vld [vmem:[%s2 + $0x58] sm:$0xff]
        %v278 = vld [vmem:[%s2 + $0x60] sm:$0xff]
        %v279 = vld [vmem:[%s2 + $0x68] sm:$0xff]
        %v280 = vld [vmem:[%s2 + $0x70] sm:$0xff]
        %v281 = vld [vmem:[%s2 + $0x78] sm:$0xff]
        %v282 = vld [vmem:[%s2 + $0x80] sm:$0xff]
        %v283 = vld [vmem:[%s2 + $0x88] sm:$0xff]
        %v284 = vld [vmem:[%s2 + $0x90] sm:$0xff]
        %v285 = vld [vmem:[%s2 + $0x98] sm:$0xff]
        %v286 = vld [vmem:[%s2 + $0xa0] sm:$0xff]
        %v287 = vld [vmem:[%s2 + $0xa8] sm:$0xff]
        %v288 = vld [vmem:[%s2 + $0xb0] sm:$0xff]
        %v289 = vld [vmem:[%s2 + $0xb8] sm:$0xff]
        %v290 = vld [vmem:[%s2 + $0xc0] sm:$0xff]
        %v291 = vld [vmem:[%s2 + $0xc8] sm:$0xff]
        %v292 = vld [vmem:[%s2 + $0xd0] sm:$0xff]
        %v293 = vld [vmem:[%s2 + $0xd8] sm:$0xff]
        %v294 = vld [vmem:[%s2 + $0xe0] sm:$0xff]
        %v295 = vld [vmem:[%s2 + $0xe8] sm:$0xff]
        %v296 = vld [vmem:[%s2 + $0xf0] sm:$0xff]
        %v297 = vld [vmem:[%s2 + $0xf8] sm:$0xff]
        %v298 = vld [vmem:[%s2 + $0x100] sm:$0xff]
        %v299 = vld [vmem:[%s2 + $0x108] sm:$0xff]
        %v300 = vld [vmem:[%s2 + $0x110] sm:$0xff]
        %v301 = vld [vmem:[%s2 + $0x118] sm:$0xff]
        %v302 = vld [vmem:[%s2 + $0x120] sm:$0xff]
        %v303 = vld [vmem:[%s2 + $0x128] sm:$0xff]
        %v304 = vld [vmem:[%s2 + $0x130] sm:$0xff]
        %v305 = vld [vmem:[%s2 + $0x138] sm:$0xff]
        %v306 = vld [vmem:[%s2 + $0x140] sm:$0xff]
        %v307 = vld [vmem:[%s2 + $0x148] sm:$0xff]
        %v308 = vld [vmem:[%s2 + $0x150] sm:$0xff]
        %v309 = vld [vmem:[%s2 + $0x158] sm:$0xff]
        %v310 = vld [vmem:[%s2 + $0x160] sm:$0xff]
        %v311 = vld [vmem:[%s2 + $0x168] sm:$0xff]
        %v312 = vld [vmem:[%s2 + $0x170] sm:$0xff]
        %v313 = vld [vmem:[%s2 + $0x178] sm:$0xff]
        %v314 = vld [vmem:[%s2 + $0x180] sm:$0xff]
        %v315 = vld [vmem:[%s2 + $0x188] sm:$0xff]
        %v316 = vld [vmem:[%s2 + $0x190] sm:$0xff]
        %v317 = vld [vmem:[%s2 + $0x198] sm:$0xff]
        %v318 = vld [vmem:[%s2 + $0x1a0] sm:$0xff]
        %v319 = vld [vmem:[%s2 + $0x1a8] sm:$0xff]
        %v320 = vld [vmem:[%s2 + $0x1b0] sm:$0xff]
        %v321 = vld [vmem:[%s2 + $0x1b8] sm:$0xff]
        %v322 = vld [vmem:[%s2 + $0x1c0] sm:$0xff]
        %v323 = vld [vmem:[%s2 + $0x1c8] sm:$0xff]
        %v324 = vld [vmem:[%s2 + $0x1d0] sm:$0xff]
        %v325 = vld [vmem:[%s2 + $0x1d8] sm:$0xff]
        %v326 = vld [vmem:[%s2 + $0x1e0] sm:$0xff]
        %v327 = vld [vmem:[%s2 + $0x1e8] sm:$0xff]
        %v328 = vld [vmem:[%s2 + $0x1f0] sm:$0xff]
        %v329 = vld [vmem:[%s2 + $0x1f8] sm:$0xff]
        %v330 = vld [vmem:[%s2 + $0x200] sm:$0xff]
        %v331 = vld [vmem:[%s2 + $0x208] sm:$0xff]
        %v332 = vld [vmem:[%s2 + $0x210] sm:$0xff]
        %v333 = vld [vmem:[%s2 + $0x218] sm:$0xff]
        %v334 = vld [vmem:[%s2 + $0x220] sm:$0xff]
        %v335 = vld [vmem:[%s2 + $0x228] sm:$0xff]
        %v336 = vld [vmem:[%s2 + $0x230] sm:$0xff]
        %v337 = vld [vmem:[%s2 + $0x238] sm:$0xff]
        %v338 = vld [vmem:[%s2 + $0x240] sm:$0xff]
        %v339 = vld [vmem:[%s2 + $0x248] sm:$0xff]
        %v340 = vld [vmem:[%s2 + $0x250] sm:$0xff]
        %v341 = vld [vmem:[%s2 + $0x258] sm:$0xff]
        %v342 = vld [vmem:[%s2 + $0x260] sm:$0xff]
        %v343 = vld [vmem:[%s2 + $0x268] sm:$0xff]
        %v344 = vld [vmem:[%s2 + $0x270] sm:$0xff]
        %v345 = vld [vmem:[%s2 + $0x278] sm:$0xff]
        %v346 = vld [vmem:[%s2 + $0x280] sm:$0xff]
        %v347 = vld [vmem:[%s2 + $0x288] sm:$0xff]
        %v348 = vld [vmem:[%s2 + $0x290] sm:$0xff]
        %v349 = vld [vmem:[%s2 + $0x298] sm:$0xff]
        %v350 = vld [vmem:[%s2 + $0x2a0] sm:$0xff]
        %v351 = vld [vmem:[%s2 + $0x2a8] sm:$0xff]
        %v352 = vld [vmem:[%s2 + $0x2b0] sm:$0xff]
        %v353 = vld [vmem:[%s2 + $0x2b8] sm:$0xff]
        %v354 = vld [vmem:[%s2 + $0x2c0] sm:$0xff]
        %v355 = vld [vmem:[%s2 + $0x2c8] sm:$0xff]
        %v356 = vld [vmem:[%s2 + $0x2d0] sm:$0xff]
        %v357 = vld [vmem:[%s2 + $0x2d8] sm:$0xff]
        %v358 = vld [vmem:[%s2 + $0x2e0] sm:$0xff]
        %v359 = vld [vmem:[%s2 + $0x2e8] sm:$0xff]
        %v360 = vld [vmem:[%s2 + $0x2f0] sm:$0xff]
        %v361 = vld [vmem:[%s2 + $0x2f8] sm:$0xff]
        %v362 = vld [vmem:[%s3] sm:$0x1]
        %v363 = vld [vmem:[%s259] sm:$0xff]
        %v364 = vsel %vm265, 1, 0
        %vm365 = vcmp.eq.s32.totalorder %v364, 1
        %v366 = vsel %vm365, %v363, 0.0
        %vm367 = vcmask 72704
        %v368 = vsel %vm367, %v366, 0.0
        %369 = vadd.xlane.f32.xlu0 %v368
        %v370 = vpop.xlane.xlu0 %369
        %vm371 = vcmp.gt.f32.partialorder %v366, 0.0
        %v372 = vsel %vm371, %v366, 1.0
        %v373 = vlog2.pop %v372
        %v374 = vmul.f32 %v373, 0.6931472
        %v375 = vmul.f32 %v366, %v374
        %v376 = vsel %vm371, %v375, 0.0
        %v377 = vsel %vm367, %v376, 0.0
        %378 = vadd.xlane.f32.xlu0 %v377
        %v379 = vpop.xlane.xlu0 %378
        %v380 = vrot.slane %v379, 4
        %v381 = vadd.f32 %v379, %v380
        %v382 = vrot.slane %v381, 2
        %v383 = vadd.f32 %v381, %v382
        %v384 = vrot.slane %v383, 1
        %v385 = vadd.f32 %v383, %v384
        %s386 = vtos %v385
        %s387 = smul.f32 %s386, 2.0
        %v388 = vld [vmem:[%s250] sm:$0xff]
        %v389 = vld [vmem:[%s250 + $0x8] sm:$0xff]
        %v390 = vld [vmem:[%s250 + $0x10] sm:$0xff]
        %v391 = vld [vmem:[%s250 + $0x18] sm:$0xff]
        %v392 = vld [vmem:[%s250 + $0x20] sm:$0xff]
        %v393 = vld [vmem:[%s250 + $0x28] sm:$0xff]
        %v395 = vlaneseq
        %v396 = vshrl.u32 %v395, 7
        %v397 = vsub.s32 0, %v396
        %v398 = vrot.slane %v362, %v397
        %400 = vmatprep.subr.mxu0 0.0
        %401 = vmatpush1.msra.mxu0 %v266
        %402 = vmatprep.subr.mxu0 0.0
        %403 = vmatpush1.msra.mxu0 %v267
        %404 = vmatprep.subr.mxu0 0.0
        %405 = vmatpush1.msra.mxu0 %v268
        %406 = vmatprep.subr.mxu0 0.0
        %407 = vmatpush1.msra.mxu0 %v269
        %408 = vmatprep.subr.mxu0 0.0
        %409 = vmatpush1.msra.mxu0 %v270
        %410 = vmatprep.subr.mxu0 0.0
        %411 = vmatpush1.msra.mxu0 %v271
        %412 = vmatprep.subr.mxu0 0.0
        %413 = vmatpush1.msra.mxu0 %v272
        %414 = vmatprep.subr.mxu0 0.0
        %415 = vmatpush1.msra.mxu0 %v273
        %416 = vmatprep.subr.mxu0 0.0
        %417 = vmatpush1.msra.mxu0 %v274
        %418 = vmatprep.subr.mxu0 0.0
        %419 = vmatpush1.msra.mxu0 %v275
        %420 = vmatprep.subr.mxu0 0.0
        %421 = vmatpush1.msra.mxu0 %v276
        %422 = vmatprep.subr.mxu0 0.0
        %423 = vmatpush1.msra.mxu0 %v277
        %424 = vmatprep.subr.mxu0 0.0
        %425 = vmatpush1.msra.mxu0 %v278
        %426 = vmatprep.subr.mxu0 0.0
        %427 = vmatpush1.msra.mxu0 %v279
        %428 = vmatprep.subr.mxu0 0.0
        %429 = vmatpush1.msra.mxu0 %v280
        %430 = vmatprep.subr.mxu0 0.0
        %431 = vmatpush1.msra.mxu0 %v281
        %432 = vmatprep.subr.mxu0 0.0
        %433 = vmatpush1.msra.mxu0 %v282
        %434 = vmatprep.subr.mxu0 0.0
        %435 = vmatpush1.msra.mxu0 %v283
        %436 = vmatprep.subr.mxu0 0.0
        %437 = vmatpush1.msra.mxu0 %v284
        %438 = vmatprep.subr.mxu0 0.0
        %439 = vmatpush1.msra.mxu0 %v285
        %440 = vmatprep.subr.mxu0 0.0
        %441 = vmatpush1.msra.mxu0 %v286
        %442 = vmatprep.subr.mxu0 0.0
        %443 = vmatpush1.msra.mxu0 %v287
        %444 = vmatprep.subr.mxu0 0.0
        %445 = vmatpush1.msra.mxu0 %v288
        %446 = vmatprep.subr.mxu0 0.0
        %447 = vmatpush1.msra.mxu0 %v289
        %448 = vmatprep.subr.mxu0 0.0
        %449 = vmatpush1.msra.mxu0 %v290
        %450 = vmatprep.subr.mxu0 0.0
        %451 = vmatpush1.msra.mxu0 %v291
        %452 = vmatprep.subr.mxu0 0.0
        %453 = vmatpush1.msra.mxu0 %v292
        %454 = vmatprep.subr.mxu0 0.0
        %455 = vmatpush1.msra.mxu0 %v293
        %456 = vmatprep.subr.mxu0 0.0
        %457 = vmatpush1.msra.mxu0 %v294
        %458 = vmatprep.subr.mxu0 0.0
        %459 = vmatpush1.msra.mxu0 %v295
        %460 = vmatprep.subr.mxu0 0.0
        %461 = vmatpush1.msra.mxu0 %v296
        %462 = vmatprep.subr.mxu0 0.0
        %463 = vmatpush1.msra.mxu0 %v297
        %464 = vmatprep.mubr.f32.mxu0 %v389
        %465 = vmatmul.mubr.f32.gmra.mrb[0].mxu0 %v388
        %v466 = vpop.f32.mrb[0].mxu0
        %v467 = vadd.f32 %v398, %v466
        %v468 = vpop.f32.mrb[0].mxu0
        %469 = vdwg.mxu0
        %470 = vmatprep.subr.mxu0 0.0
        %471 = vmatpush1.msra.mxu0 %v298
        %472 = vmatprep.subr.mxu0 0.0
        %473 = vmatpush1.msra.mxu0 %v299
        %474 = vmatprep.subr.mxu0 0.0
        %475 = vmatpush1.msra.mxu0 %v300
        %476 = vmatprep.subr.mxu0 0.0
        %477 = vmatpush1.msra.mxu0 %v301
        %478 = vmatprep.subr.mxu0 0.0
        %479 = vmatpush1.msra.mxu0 %v302
        %480 = vmatprep.subr.mxu0 0.0
        %481 = vmatpush1.msra.mxu0 %v303
        %482 = vmatprep.subr.mxu0 0.0
        %483 = vmatpush1.msra.mxu0 %v304
        %484 = vmatprep.subr.mxu0 0.0
        %485 = vmatpush1.msra.mxu0 %v305
        %486 = vmatprep.subr.mxu0 0.0
        %487 = vmatpush1.msra.mxu0 %v306
        %488 = vmatprep.subr.mxu0 0.0
        %489 = vmatpush1.msra.mxu0 %v307
        %490 = vmatprep.subr.mxu0 0.0
        %491 = vmatpush1.msra.mxu0 %v308
        %492 = vmatprep.subr.mxu0 0.0
        %493 = vmatpush1.msra.mxu0 %v309
        %494 = vmatprep.subr.mxu0 0.0
        %495 = vmatpush1.msra.mxu0 %v310
        %496 = vmatprep.subr.mxu0 0.0
        %497 = vmatpush1.msra.mxu0 %v311
        %498 = vmatprep.subr.mxu0 0.0
        %499 = vmatpush1.msra.mxu0 %v312
        %500 = vmatprep.subr.mxu0 0.0
        %501 = vmatpush1.msra.mxu0 %v313
        %502 = vmatprep.subr.mxu0 0.0
        %503 = vmatpush1.msra.mxu0 %v314
        %504 = vmatprep.subr.mxu0 0.0
        %505 = vmatpush1.msra.mxu0 %v315
        %506 = vmatprep.subr.mxu0 0.0
        %507 = vmatpush1.msra.mxu0 %v316
        %508 = vmatprep.subr.mxu0 0.0
        %509 = vmatpush1.msra.mxu0 %v317
        %510 = vmatprep.subr.mxu0 0.0
        %511 = vmatpush1.msra.mxu0 %v318
        %512 = vmatprep.subr.mxu0 0.0
        %513 = vmatpush1.msra.mxu0 %v319
        %514 = vmatprep.subr.mxu0 0.0
        %515 = vmatpush1.msra.mxu0 %v320
        %516 = vmatprep.subr.mxu0 0.0
        %517 = vmatpush1.msra.mxu0 %v321
        %518 = vmatprep.subr.mxu0 0.0
        %519 = vmatpush1.msra.mxu0 %v322
        %520 = vmatprep.subr.mxu0 0.0
        %521 = vmatpush1.msra.mxu0 %v323
        %522 = vmatprep.subr.mxu0 0.0
        %523 = vmatpush1.msra.mxu0 %v324
        %524 = vmatprep.subr.mxu0 0.0
        %525 = vmatpush1.msra.mxu0 %v325
        %526 = vmatprep.subr.mxu0 0.0
        %527 = vmatpush1.msra.mxu0 %v326
        %528 = vmatprep.subr.mxu0 0.0
        %529 = vmatpush1.msra.mxu0 %v327
        %530 = vmatprep.subr.mxu0 0.0
        %531 = vmatpush1.msra.mxu0 %v328
        %532 = vmatprep.subr.mxu0 0.0
        %533 = vmatpush1.msra.mxu0 %v329
        %534 = vmatprep.mubr.f32.mxu0 %v391
        %535 = vmatmul.mubr.f32.gmra.mrb[0].mxu0 %v390
        %v536 = vpop.f32.mrb[0].mxu0
        %v537 = vadd.f32 %v467, %v536
        %v538 = vpop.f32.mrb[0].mxu0
        %539 = vdwg.mxu0
        %540 = vmatprep.subr.mxu0 0.0
        %541 = vmatpush1.msra.mxu0 %v330
        %542 = vmatprep.subr.mxu0 0.0
        %543 = vmatpush1.msra.mxu0 %v331
        %544 = vmatprep.subr.mxu0 0.0
        %545 = vmatpush1.msra.mxu0 %v332
        %546 = vmatprep.subr.mxu0 0.0
        %547 = vmatpush1.msra.mxu0 %v333
        %548 = vmatprep.subr.mxu0 0.0
        %549 = vmatpush1.msra.mxu0 %v334
        %550 = vmatprep.subr.mxu0 0.0
        %551 = vmatpush1.msra.mxu0 %v335
        %552 = vmatprep.subr.mxu0 0.0
        %553 = vmatpush1.msra.mxu0 %v336
        %554 = vmatprep.subr.mxu0 0.0
        %555 = vmatpush1.msra.mxu0 %v337
        %556 = vmatprep.subr.mxu0 0.0
        %557 = vmatpush1.msra.mxu0 %v338
        %558 = vmatprep.subr.mxu0 0.0
        %559 = vmatpush1.msra.mxu0 %v339
        %560 = vmatprep.subr.mxu0 0.0
        %561 = vmatpush1.msra.mxu0 %v340
        %562 = vmatprep.subr.mxu0 0.0
        %563 = vmatpush1.msra.mxu0 %v341
        %564 = vmatprep.subr.mxu0 0.0
        %565 = vmatpush1.msra.mxu0 %v342
        %566 = vmatprep.subr.mxu0 0.0
        %567 = vmatpush1.msra.mxu0 %v343
        %568 = vmatprep.subr.mxu0 0.0
        %569 = vmatpush1.msra.mxu0 %v344
        %570 = vmatprep.subr.mxu0 0.0
        %571 = vmatpush1.msra.mxu0 %v345
        %572 = vmatprep.subr.mxu0 0.0
        %573 = vmatpush1.msra.mxu0 %v346
        %574 = vmatprep.subr.mxu0 0.0
        %575 = vmatpush1.msra.mxu0 %v347
        %576 = vmatprep.subr.mxu0 0.0
        %577 = vmatpush1.msra.mxu0 %v348
        %578 = vmatprep.subr.mxu0 0.0
        %579 = vmatpush1.msra.mxu0 %v349
        %580 = vmatprep.subr.mxu0 0.0
        %581 = vmatpush1.msra.mxu0 %v350
        %582 = vmatprep.subr.mxu0 0.0
        %583 = vmatpush1.msra.mxu0 %v351
        %584 = vmatprep.subr.mxu0 0.0
        %585 = vmatpush1.msra.mxu0 %v352
        %586 = vmatprep.subr.mxu0 0.0
        %587 = vmatpush1.msra.mxu0 %v353
        %588 = vmatprep.subr.mxu0 0.0
        %589 = vmatpush1.msra.mxu0 %v354
        %590 = vmatprep.subr.mxu0 0.0
        %591 = vmatpush1.msra.mxu0 %v355
        %592 = vmatprep.subr.mxu0 0.0
        %593 = vmatpush1.msra.mxu0 %v356
        %594 = vmatprep.subr.mxu0 0.0
        %595 = vmatpush1.msra.mxu0 %v357
        %596 = vmatprep.subr.mxu0 0.0
        %597 = vmatpush1.msra.mxu0 %v358
        %598 = vmatprep.subr.mxu0 0.0
        %599 = vmatpush1.msra.mxu0 %v359
        %600 = vmatprep.subr.mxu0 0.0
        %601 = vmatpush1.msra.mxu0 %v360
        %602 = vmatprep.subr.mxu0 0.0
        %603 = vmatpush1.msra.mxu0 %v361
        %604 = vmatprep.mubr.f32.mxu0 %v393
        %605 = vmatmul.mubr.f32.gmra.mrb[0].mxu0 %v392
        %v606 = vpop.f32.mrb[0].mxu0
        %v607 = vadd.f32 %v537, %v606
        %v608 = vpop.f32.mrb[0].mxu0
        %609 = vdwg.mxu0
        %v610 = vsel %vm367, %v607, -inf
        %611 = vmax.xlane.f32.xlu0 %v610
        %v612 = vpop.xlane.xlu0 %611
        %v613 = vsub.f32 %v607, %v612
        %v614 = vmul.f32 %v613, 1.442695
        %v615 = vpow.pop %v614
        %v616 = vsel %vm367, %v615, 0.0
        %617 = vadd.xlane.f32.xlu0 %v616
        %v618 = vpop.xlane.xlu0 %617
        %v619 = vlog2.pop %v618
        %v620 = vmul.f32 %v619, 0.6931472
        %v621 = vmul.f32 %v366, %v607
        %v622 = vsel %vm367, %v621, 0.0
        %623 = vadd.xlane.f32.xlu0 %v622
        %v624 = vpop.xlane.xlu0 %623
        %v625 = vadd.f32 %v612, %v620
        %v626 = vmul.f32 %v370, %v625
        %v627 = vsub.f32 %v624, %v626
        %v628 = vsel %vm265, %v627, 0.0
        %vm629 = vcmask 7168
        %v630 = vsel %vm629, %v628, 0.0
        %631 = vadd.xlane.f32.xlu0 %v630
        %v632 = vpop.xlane.xlu0 %631
        %v633 = vrot.slane %v632, 4
        %v634 = vadd.f32 %v632, %v633
        %v635 = vrot.slane %v634, 2
        %v636 = vadd.f32 %v634, %v635
        %v637 = vrot.slane %v636, 1
        %v638 = vadd.f32 %v636, %v637
        %s639 = vtos %v638
        %s640 = ssub.f32 %s387, %s639
        %v641 = vld [vmem:[%s255] sm:$0xff]
        %v642 = vld [vmem:[%s255 + $0x8] sm:$0xff]
        %v643 = vld [vmem:[%s255 + $0x10] sm:$0xff]
        %v644 = vld [vmem:[%s255 + $0x18] sm:$0xff]
        %v645 = vld [vmem:[%s255 + $0x20] sm:$0xff]
        %v646 = vld [vmem:[%s255 + $0x28] sm:$0xff]
        %647 = vmatprep.subr.mxu0 0.0
        %648 = vmatpush1.msra.mxu0 %v266
        %649 = vmatprep.subr.mxu0 0.0
        %650 = vmatpush1.msra.mxu0 %v267
        %651 = vmatprep.subr.mxu0 0.0
        %652 = vmatpush1.msra.mxu0 %v268
        %653 = vmatprep.subr.mxu0 0.0
        %654 = vmatpush1.msra.mxu0 %v269
        %655 = vmatprep.subr.mxu0 0.0
        %656 = vmatpush1.msra.mxu0 %v270
        %657 = vmatprep.subr.mxu0 0.0
        %658 = vmatpush1.msra.mxu0 %v271
        %659 = vmatprep.subr.mxu0 0.0
        %660 = vmatpush1.msra.mxu0 %v272
        %661 = vmatprep.subr.mxu0 0.0
        %662 = vmatpush1.msra.mxu0 %v273
        %663 = vmatprep.subr.mxu0 0.0
        %664 = vmatpush1.msra.mxu0 %v274
        %665 = vmatprep.subr.mxu0 0.0
        %666 = vmatpush1.msra.mxu0 %v275
        %667 = vmatprep.subr.mxu0 0.0
        %668 = vmatpush1.msra.mxu0 %v276
        %669 = vmatprep.subr.mxu0 0.0
        %670 = vmatpush1.msra.mxu0 %v277
        %671 = vmatprep.subr.mxu0 0.0
        %672 = vmatpush1.msra.mxu0 %v278
        %673 = vmatprep.subr.mxu0 0.0
        %674 = vmatpush1.msra.mxu0 %v279
        %675 = vmatprep.subr.mxu0 0.0
        %676 = vmatpush1.msra.mxu0 %v280
        %677 = vmatprep.subr.mxu0 0.0
        %678 = vmatpush1.msra.mxu0 %v281
        %679 = vmatprep.subr.mxu0 0.0
        %680 = vmatpush1.msra.mxu0 %v282
        %681 = vmatprep.subr.mxu0 0.0
        %682 = vmatpush1.msra.mxu0 %v283
        %683 = vmatprep.subr.mxu0 0.0
        %684 = vmatpush1.msra.mxu0 %v284
        %685 = vmatprep.subr.mxu0 0.0
        %686 = vmatpush1.msra.mxu0 %v285
        %687 = vmatprep.subr.mxu0 0.0
        %688 = vmatpush1.msra.mxu0 %v286
        %689 = vmatprep.subr.mxu0 0.0
        %690 = vmatpush1.msra.mxu0 %v287
        %691 = vmatprep.subr.mxu0 0.0
        %692 = vmatpush1.msra.mxu0 %v288
        %693 = vmatprep.subr.mxu0 0.0
        %694 = vmatpush1.msra.mxu0 %v289
        %695 = vmatprep.subr.mxu0 0.0
        %696 = vmatpush1.msra.mxu0 %v290
        %697 = vmatprep.subr.mxu0 0.0
        %698 = vmatpush1.msra.mxu0 %v291
        %699 = vmatprep.subr.mxu0 0.0
        %700 = vmatpush1.msra.mxu0 %v292
        %701 = vmatprep.subr.mxu0 0.0
        %702 = vmatpush1.msra.mxu0 %v293
        %703 = vmatprep.subr.mxu0 0.0
        %704 = vmatpush1.msra.mxu0 %v294
        %705 = vmatprep.subr.mxu0 0.0
        %706 = vmatpush1.msra.mxu0 %v295
        %707 = vmatprep.subr.mxu0 0.0
        %708 = vmatpush1.msra.mxu0 %v296
        %709 = vmatprep.subr.mxu0 0.0
        %710 = vmatpush1.msra.mxu0 %v297
        %711 = vmatprep.mubr.f32.mxu0 %v642
        %712 = vmatmul.mubr.f32.gmra.mrb[0].mxu0 %v641
        %v713 = vpop.f32.mrb[0].mxu0
        %v714 = vadd.f32 %v398, %v713
        %v715 = vpop.f32.mrb[0].mxu0
        %716 = vdwg.mxu0
        %717 = vmatprep.subr.mxu0 0.0
        %718 = vmatpush1.msra.mxu0 %v298
        %719 = vmatprep.subr.mxu0 0.0
        %720 = vmatpush1.msra.mxu0 %v299
        %721 = vmatprep.subr.mxu0 0.0
        %722 = vmatpush1.msra.mxu0 %v300
        %723 = vmatprep.subr.mxu0 0.0
        %724 = vmatpush1.msra.mxu0 %v301
        %725 = vmatprep.subr.mxu0 0.0
        %726 = vmatpush1.msra.mxu0 %v302
        %727 = vmatprep.subr.mxu0 0.0
        %728 = vmatpush1.msra.mxu0 %v303
        %729 = vmatprep.subr.mxu0 0.0
        %730 = vmatpush1.msra.mxu0 %v304
        %731 = vmatprep.subr.mxu0 0.0
        %732 = vmatpush1.msra.mxu0 %v305
        %733 = vmatprep.subr.mxu0 0.0
        %734 = vmatpush1.msra.mxu0 %v306
        %735 = vmatprep.subr.mxu0 0.0
        %736 = vmatpush1.msra.mxu0 %v307
        %737 = vmatprep.subr.mxu0 0.0
        %738 = vmatpush1.msra.mxu0 %v308
        %739 = vmatprep.subr.mxu0 0.0
        %740 = vmatpush1.msra.mxu0 %v309
        %741 = vmatprep.subr.mxu0 0.0
        %742 = vmatpush1.msra.mxu0 %v310
        %743 = vmatprep.subr.mxu0 0.0
        %744 = vmatpush1.msra.mxu0 %v311
        %745 = vmatprep.subr.mxu0 0.0
        %746 = vmatpush1.msra.mxu0 %v312
        %747 = vmatprep.subr.mxu0 0.0
        %748 = vmatpush1.msra.mxu0 %v313
        %749 = vmatprep.subr.mxu0 0.0
        %750 = vmatpush1.msra.mxu0 %v314
        %751 = vmatprep.subr.mxu0 0.0
        %752 = vmatpush1.msra.mxu0 %v315
        %753 = vmatprep.subr.mxu0 0.0
        %754 = vmatpush1.msra.mxu0 %v316
        %755 = vmatprep.subr.mxu0 0.0
        %756 = vmatpush1.msra.mxu0 %v317
        %757 = vmatprep.subr.mxu0 0.0
        %758 = vmatpush1.msra.mxu0 %v318
        %759 = vmatprep.subr.mxu0 0.0
        %760 = vmatpush1.msra.mxu0 %v319
        %761 = vmatprep.subr.mxu0 0.0
        %762 = vmatpush1.msra.mxu0 %v320
        %763 = vmatprep.subr.mxu0 0.0
        %764 = vmatpush1.msra.mxu0 %v321
        %765 = vmatprep.subr.mxu0 0.0
        %766 = vmatpush1.msra.mxu0 %v322
        %767 = vmatprep.subr.mxu0 0.0
        %768 = vmatpush1.msra.mxu0 %v323
        %769 = vmatprep.subr.mxu0 0.0
        %770 = vmatpush1.msra.mxu0 %v324
        %771 = vmatprep.subr.mxu0 0.0
        %772 = vmatpush1.msra.mxu0 %v325
        %773 = vmatprep.subr.mxu0 0.0
        %774 = vmatpush1.msra.mxu0 %v326
        %775 = vmatprep.subr.mxu0 0.0
        %776 = vmatpush1.msra.mxu0 %v327
        %777 = vmatprep.subr.mxu0 0.0
        %778 = vmatpush1.msra.mxu0 %v328
        %779 = vmatprep.subr.mxu0 0.0
        %780 = vmatpush1.msra.mxu0 %v329
        %781 = vmatprep.mubr.f32.mxu0 %v644
        %782 = vmatmul.mubr.f32.gmra.mrb[0].mxu0 %v643
        %v783 = vpop.f32.mrb[0].mxu0
        %v784 = vadd.f32 %v714, %v783
        %v785 = vpop.f32.mrb[0].mxu0
        %786 = vdwg.mxu0
        %787 = vmatprep.subr.mxu0 0.0
        %788 = vmatpush1.msra.mxu0 %v330
        %789 = vmatprep.subr.mxu0 0.0
        %790 = vmatpush1.msra.mxu0 %v331
        %791 = vmatprep.subr.mxu0 0.0
        %792 = vmatpush1.msra.mxu0 %v332
        %793 = vmatprep.subr.mxu0 0.0
        %794 = vmatpush1.msra.mxu0 %v333
        %795 = vmatprep.subr.mxu0 0.0
        %796 = vmatpush1.msra.mxu0 %v334
        %797 = vmatprep.subr.mxu0 0.0
        %798 = vmatpush1.msra.mxu0 %v335
        %799 = vmatprep.subr.mxu0 0.0
        %800 = vmatpush1.msra.mxu0 %v336
        %801 = vmatprep.subr.mxu0 0.0
        %802 = vmatpush1.msra.mxu0 %v337
        %803 = vmatprep.subr.mxu0 0.0
        %804 = vmatpush1.msra.mxu0 %v338
        %805 = vmatprep.subr.mxu0 0.0
        %806 = vmatpush1.msra.mxu0 %v339
        %807 = vmatprep.subr.mxu0 0.0
        %808 = vmatpush1.msra.mxu0 %v340
        %809 = vmatprep.subr.mxu0 0.0
        %810 = vmatpush1.msra.mxu0 %v341
        %811 = vmatprep.subr.mxu0 0.0
        %812 = vmatpush1.msra.mxu0 %v342
        %813 = vmatprep.subr.mxu0 0.0
        %814 = vmatpush1.msra.mxu0 %v343
        %815 = vmatprep.subr.mxu0 0.0
        %816 = vmatpush1.msra.mxu0 %v344
        %817 = vmatprep.subr.mxu0 0.0
        %818 = vmatpush1.msra.mxu0 %v345
        %819 = vmatprep.subr.mxu0 0.0
        %820 = vmatpush1.msra.mxu0 %v346
        %821 = vmatprep.subr.mxu0 0.0
        %822 = vmatpush1.msra.mxu0 %v347
        %823 = vmatprep.subr.mxu0 0.0
        %824 = vmatpush1.msra.mxu0 %v348
        %825 = vmatprep.subr.mxu0 0.0
        %826 = vmatpush1.msra.mxu0 %v349
        %827 = vmatprep.subr.mxu0 0.0
        %828 = vmatpush1.msra.mxu0 %v350
        %829 = vmatprep.subr.mxu0 0.0
        %830 = vmatpush1.msra.mxu0 %v351
        %831 = vmatprep.subr.mxu0 0.0
        %832 = vmatpush1.msra.mxu0 %v352
        %833 = vmatprep.subr.mxu0 0.0
        %834 = vmatpush1.msra.mxu0 %v353
        %835 = vmatprep.subr.mxu0 0.0
        %836 = vmatpush1.msra.mxu0 %v354
        %837 = vmatprep.subr.mxu0 0.0
        %838 = vmatpush1.msra.mxu0 %v355
        %839 = vmatprep.subr.mxu0 0.0
        %840 = vmatpush1.msra.mxu0 %v356
        %841 = vmatprep.subr.mxu0 0.0
        %842 = vmatpush1.msra.mxu0 %v357
        %843 = vmatprep.subr.mxu0 0.0
        %844 = vmatpush1.msra.mxu0 %v358
        %845 = vmatprep.subr.mxu0 0.0
        %846 = vmatpush1.msra.mxu0 %v359
        %847 = vmatprep.subr.mxu0 0.0
        %848 = vmatpush1.msra.mxu0 %v360
        %849 = vmatprep.subr.mxu0 0.0
        %850 = vmatpush1.msra.mxu0 %v361
        %851 = vmatprep.mubr.f32.mxu0 %v646
        %852 = vmatmul.mubr.f32.gmra.mrb[0].mxu0 %v645
        %v853 = vpop.f32.mrb[0].mxu0
        %v854 = vadd.f32 %v784, %v853
        %v855 = vpop.f32.mrb[0].mxu0
        %856 = vdwg.mxu0
        %v857 = vsel %vm367, %v854, -inf
        %858 = vmax.xlane.f32.xlu0 %v857
        %v859 = vpop.xlane.xlu0 %858
        %v860 = vsub.f32 %v854, %v859
        %v861 = vmul.f32 %v860, 1.442695
        %v862 = vpow.pop %v861
        %v863 = vsel %vm367, %v862, 0.0
        %864 = vadd.xlane.f32.xlu0 %v863
        %v865 = vpop.xlane.xlu0 %864
        %v866 = vlog2.pop %v865
        %v867 = vmul.f32 %v866, 0.6931472
        %v868 = vmul.f32 %v366, %v854
        %v869 = vsel %vm367, %v868, 0.0
        %870 = vadd.xlane.f32.xlu0 %v869
        %v871 = vpop.xlane.xlu0 %870
        %v872 = vadd.f32 %v859, %v867
        %v873 = vmul.f32 %v370, %v872
        %v874 = vsub.f32 %v871, %v873
        %v875 = vsel %vm265, %v874, 0.0
        %v876 = vsel %vm629, %v875, 0.0
        %877 = vadd.xlane.f32.xlu0 %v876
        %v878 = vpop.xlane.xlu0 %877
        %v879 = vrot.slane %v878, 4
        %v880 = vadd.f32 %v878, %v879
        %v881 = vrot.slane %v880, 2
        %v882 = vadd.f32 %v880, %v881
        %v883 = vrot.slane %v882, 1
        %v884 = vadd.f32 %v882, %v883
        %s885 = vtos %v884
        %s886 = ssub.f32 %s640, %s885
        %v887 = vstv %s886
        %888 = vst [vmem:[%s245] sm:$0xff] %v887
        %s889 = sand.u32 %s147, 1
        %s890 = scalar_lea.sflag [#allocation3], %s889
        %s891 = sand.u32 %s147, 1
        %s892 = smul.addr %s891, 8
        %s893 = scalar_lea.vmem [#allocation2], %s892
        // Predicated region
        $region41: #{tpu_custom_call.1} parent=39 // pred_check
          %p894 = pneg %p157
        $region42: #{tpu_custom_call.1} parent=39 // pred_check_branch
          %896 = sbr.rel (%p894) target = $region44
        $region43: #{tpu_custom_call.1} parent=39 // pred_region
          %s898 = ssub.s32 128, 128
          %899 = vsyncadd %s890, %s898
          %s900 = smul.addr %s19, 128
          %s901 = scalar_lea.hbm %s5, %s900
          %s903 = sshll.u32 %s893, 4
          %s904 = int_to_ptr.vmem [resolvable:$true] %s903
          %906 = dma.vmem_to_hbm [thread:$0]  %s904, 128, %s901, %s890
        $region44: #{tpu_custom_call.1} parent=39 // pred_fallthru
          _
      $region40: #{tpu_custom_call.1} parent=5 // pred_fallthru
        _
      %p907 = scmp.le.s32.totalorder 2, %s14
      // Predicated region
      $region45: #{tpu_custom_call.1} parent=5 // pred_check
        %p908 = pneg %p907
      $region46: #{tpu_custom_call.1} parent=5 // pred_check_branch
        %910 = sbr.rel (%p908) target = $region48
      $region47: #{tpu_custom_call.1} parent=5 // pred_region
        %s911 = ssub.s32 %s14, 2
        // Predicated region
        $region49: #{tpu_custom_call.1} parent=47 // pred_check
          %p912 = pneg %p163
        $region50: #{tpu_custom_call.1} parent=47 // pred_check_branch
          %914 = sbr.rel (%p912) target = $region52
        $region51: #{tpu_custom_call.1} parent=47 // pred_region
          %s915 = sand.u32 %s148, 1
          %s916 = scalar_lea.sflag [#allocation3], %s915
          %s917 = sand.u32 %s148, 1
          %s918 = smul.addr %s917, 8
          %s919 = scalar_lea.vmem [#allocation2], %s918
          %920 = dma.done %s916, 128
        $region52: #{tpu_custom_call.1} parent=47 // pred_fallthru
          _
      $region48: #{tpu_custom_call.1} parent=5 // pred_fallthru
        _
    $region6: #{tpu_custom_call.1} parent=1 // loop_footer
      %s18 = sadd.s32 1, %s14
    $region7: #{tpu_custom_call.1} parent=1 // loop_footer_branch
      %13 = sbr.rel target = $region3
    $region8: #{tpu_custom_call.1} parent=1 // loop_exit
      _
    %921 = vsyncpa [#allocation3], 1
    %s922 = scalar_lea.sflag [#allocation3], 1
    %923 = vsyncpa %s922, 1

</llo_original>
